<compile_context>
chip_gen: v6e
topology: v6e:2x2x1
jax: 0.10.0
libtpu: 0.0.40
codegen_flags: <defaults>
</compile_context>

<pallas_src>
import functools

import jax
import jax.numpy as jnp
from jax.experimental import pallas as pl
from jax.experimental.pallas import tpu as pltpu

_LANE_CHOICES = (4096, 2048, 1024, 512, 256, 128)
_MIN_LANE = 128
_PAD_LOGIT = -1e4        # BCE(x=-1e4, y=0) == 0 exactly in f32/bf16/fp16
_NC = 2                  # leading "parallel" grid axis for sum/mean (v7x: 2 TCs)


def _pick_vmem_limit():
    """48 MiB fits every generation (v7x physical VMEM is 64 MiB); raise to
    64 MiB when the chip reports the larger 128 MiB VMEM (v5e/v6e)."""
    limit = 48 << 20
    try:
        cap = getattr(pltpu.get_tpu_info(), "vmem_capacity_bytes", None)
        if cap is not None and cap >= (96 << 20):
            limit = 64 << 20
    except Exception:
        pass
    return limit


_VMEM_LIMIT = _pick_vmem_limit()
_SUM_TILE_BYTES = 4 << 20    # per-input f32 tile footprint, sum/mean path
_NONE_TILE_BYTES = 2 << 20   # smaller: 'none' path also double-buffers output


def _cdiv(a, b):
    return -(-a // b)


def _bce_elementwise(x, y):
    # Numerically-stable binary cross entropy with logits:
    #   max(x, 0) - x*y + log(1 + exp(-|x|))
    return jnp.maximum(x, 0.0) - x * y + jnp.log1p(jnp.exp(-jnp.abs(x)))


def _partial_rows_sum(loss):
    # (BR, LANE) -> (8, LANE) via pure elementwise (VPU) adds over vreg groups.
    br, lane = loss.shape
    return jnp.sum(loss.reshape(br // 8, 8, lane), axis=0)


# --------------------------------------------------------------------------
# Kernels
# --------------------------------------------------------------------------
def _bce_sum_kernel(x_ref, y_ref, out_ref, acc_ref, *, rows, block_rows, steps,
                    may_be_partial):
    """2-D grid (core, step) sum reduction. Each core reduces its row-blocks
    into an (8, lane) accumulator and emits one (1, 1) partial."""
    c = pl.program_id(0)
    k = pl.program_id(1)

    @pl.when(k == 0)
    def _():
        acc_ref[...] = jnp.zeros_like(acc_ref)

    x = x_ref[...].astype(jnp.float32)
    y = y_ref[...].astype(jnp.float32)
    loss = _bce_elementwise(x, y)

    if not may_be_partial:
        # Rows divide evenly into blocks and blocks into cores: never mask.
        acc_ref[...] += _partial_rows_sum(loss)
    else:
        # valid rows for the (unclamped) global block index; may be <=0 for a
        # duplicated trailing block or < block_rows for the true last block.
        valid = rows - (c * steps + k) * block_rows

        @pl.when(valid >= block_rows)
        def _():
            acc_ref[...] += _partial_rows_sum(loss)

        @pl.when(valid < block_rows)
        def _():
            row_idx = jax.lax.broadcasted_iota(jnp.int32, loss.shape, 0)
            # Select (not multiply): garbage rows of a partial / duplicated
            # edge block may be NaN/Inf and must not reach the accumulator.
            masked = jnp.where(row_idx < valid, loss, 0.0)
            acc_ref[...] += _partial_rows_sum(masked)

    @pl.when(k == pl.num_programs(1) - 1)
    def _():
        # Single cross-lane/cross-sublane reduction per core at the very end.
        out_ref[...] = jnp.sum(acc_ref[...], axis=(0, 1), keepdims=True)


def _bce_sum_single_kernel(x_ref, y_ref, out_ref):
    """Whole problem fits in one VMEM block: no grid, no accumulator."""
    x = x_ref[...].astype(jnp.float32)
    y = y_ref[...].astype(jnp.float32)
    loss = _bce_elementwise(x, y)
    out_ref[...] = jnp.sum(loss, axis=(0, 1), keepdims=True)


def _bce_none_kernel(x_ref, y_ref, o_ref):
    x = x_ref[...].astype(jnp.float32)
    y = y_ref[...].astype(jnp.float32)
    o_ref[...] = _bce_elementwise(x, y).astype(o_ref.dtype)


# --------------------------------------------------------------------------
# Wrappers
# --------------------------------------------------------------------------
def _prep(inputs, targets):
    """Flatten to a lane-dense (rows, lane) slab; pad only if N % 128 != 0."""
    n = inputs.size
    flat_x = inputs.reshape(-1)
    flat_y = targets.reshape(-1)
    lane = next((l for l in _LANE_CHOICES if n % l == 0), None)
    if lane is None:
        # TODO(synk): non-128-divisible N still pays a wrapper-side pad copy;
        # a zero-copy version needs 1-D refs + in-kernel tail-lane masking.
        lane = _MIN_LANE
        pad = (-n) % lane
        # Zero-loss padding: BCE(-1e4, 0) == 0 exactly, so no mask is needed.
        flat_x = jnp.pad(flat_x, (0, pad), constant_values=_PAD_LOGIT)
        flat_y = jnp.pad(flat_y, (0, pad), constant_values=0)
    rows = flat_x.shape[0] // lane
    return flat_x.reshape(rows, lane), flat_y.reshape(rows, lane), rows, lane


def _block_rows(rows, lane, tile_bytes):
    # Size blocks by their f32 footprint (in-kernel temporaries are f32).
    target_elems = tile_bytes // 4
    br = max(8, (target_elems // lane) // 8 * 8)
    return rows if rows <= br else br


def _bce_sum_pallas(x2, y2, rows, lane):
    br = _block_rows(rows, lane, _SUM_TILE_BYTES)

    if br >= rows:
        # Single block: everything lives in VMEM, one kernel invocation.
        out = pl.pallas_call(
            _bce_sum_single_kernel,
            out_shape=jax.ShapeDtypeStruct((1, 1), jnp.float32),
            compiler_params=pltpu.CompilerParams(vmem_limit_bytes=_VMEM_LIMIT),
        )(x2, y2)
        return out[0, 0]

    nblocks = _cdiv(rows, br)
    steps = _cdiv(nblocks, _NC)
    may_be_partial = (rows % br != 0) or (nblocks != _NC * steps)

    def in_map(c, k):
        # Clamp so a duplicated trailing step never DMAs out of bounds; the
        # kernel masks it out entirely via the unclamped global index.
        return (jnp.minimum(c * steps + k, nblocks - 1), 0)

    kernel = functools.partial(
        _bce_sum_kernel, rows=rows, block_rows=br, steps=steps,
        may_be_partial=may_be_partial)

    out = pl.pallas_call(
        kernel,
        out_shape=jax.ShapeDtypeStruct((_NC, 1), jnp.float32),
        grid_spec=pltpu.PrefetchScalarGridSpec(
            num_scalar_prefetch=0,
            grid=(_NC, steps),
            in_specs=[
                pl.BlockSpec((br, lane), in_map),
                pl.BlockSpec((br, lane), in_map),
            ],
            out_specs=pl.BlockSpec((1, 1), lambda c, k: (c, 0)),
            scratch_shapes=[pltpu.VMEM((8, lane), jnp.float32)],
        ),
        compiler_params=pltpu.CompilerParams(
            dimension_semantics=("parallel", "arbitrary"),
            vmem_limit_bytes=_VMEM_LIMIT,
        ),
    )(x2, y2)
    return jnp.sum(out)   # add the per-core partials


def _bce_none_pallas(x2, y2, rows, lane, out_dtype):
    br = _block_rows(rows, lane, _NONE_TILE_BYTES)
    return pl.pallas_call(
        _bce_none_kernel,
        out_shape=jax.ShapeDtypeStruct((rows, lane), out_dtype),
        grid_spec=pltpu.PrefetchScalarGridSpec(
            num_scalar_prefetch=0,
            grid=(_cdiv(rows, br),),
            in_specs=[
                pl.BlockSpec((br, lane), lambda i: (i, 0)),
                pl.BlockSpec((br, lane), lambda i: (i, 0)),
            ],
            out_specs=pl.BlockSpec((br, lane), lambda i: (i, 0)),
        ),
        compiler_params=pltpu.CompilerParams(
            dimension_semantics=("parallel",),
            vmem_limit_bytes=_VMEM_LIMIT,
        ),
    )(x2, y2)


def bce_with_logits_loss(inputs, targets, reduction="mean", loss_weight=1.0):
    """JAX/Pallas equivalent of the PyTorch BCEWithLogitsLoss wrapper module."""
    if reduction not in ("mean", "sum", "none"):
        raise ValueError(f"unsupported reduction: {reduction}")

    # Degenerate empty-input cases (matches the PyTorch module).
    if targets.size == 0 and reduction == "mean":
        return jnp.sum(inputs) * 0.0
    if inputs.size == 0:
        if reduction == "none":
            return jnp.zeros(inputs.shape, inputs.dtype)
        return jnp.zeros((), jnp.float32)

    n = inputs.size
    x2, y2, rows, lane = _prep(inputs, targets)

    if reduction == "none":
        out2 = _bce_none_pallas(x2, y2, rows, lane, inputs.dtype)
        if rows * lane == n:
            result = out2.reshape(inputs.shape)          # free reshape
        else:
            # TODO(synk): padded path pays one output-slice copy here.
            result = out2.reshape(-1)[:n].reshape(inputs.shape)
    else:
        result = _bce_sum_pallas(x2, y2, rows, lane)
        if reduction == "mean":
            result = result / jnp.float32(n)

    if loss_weight != 1.0:
        result = loss_weight * result
    return result


class BCEWithLogitsLoss:
    """Mirror of the PyTorch module (no learnable parameters)."""

    def __init__(self, reduction: str = "mean", loss_weight: float = 1.0):
        self.reduction = reduction
        self.loss_weight = loss_weight

    def __call__(self, inputs, targets):
        return bce_with_logits_loss(
            inputs, targets, reduction=self.reduction, loss_weight=self.loss_weight
        )

    @property
    def name(self) -> str:
        return "loss_bce"


if __name__ == "__main__":
    key = jax.random.PRNGKey(0)
    k1, k2, k3, k4 = jax.random.split(key, 4)

    def ref_loss(x, t, reduction="mean"):
        x = x.astype(jnp.float32)
        t = t.astype(jnp.float32)
        per = jnp.maximum(x, 0.0) - x * t + jnp.log1p(jnp.exp(-jnp.abs(x)))
        if reduction == "mean":
            return jnp.mean(per)
        if reduction == "sum":
            return jnp.sum(per)
        return per

    # Small NCHW case -- single-block (zero-grid) path.
    x = jax.random.normal(k1, (2, 4, 16, 16), dtype=jnp.float32)
    t = (jax.random.uniform(k2, (2, 4, 16, 16)) > 0.5).astype(jnp.float32)
    loss = jax.block_until_ready(BCEWithLogitsLoss(reduction="mean")(x, t))
    assert jnp.allclose(loss, ref_loss(x, t, "mean"), atol=1e-5, rtol=1e-5)
    loss_sum = jax.block_until_ready(BCEWithLogitsLoss(reduction="sum")(x, t))
    assert jnp.allclose(loss_sum, ref_loss(x, t, "sum"), rtol=1e-5, atol=1e-3)
    loss_none = jax.block_until_ready(BCEWithLogitsLoss(reduction="none")(x, t))
    assert loss_none.shape == x.shape and loss_none.dtype == x.dtype
    assert jnp.allclose(loss_none, ref_loss(x, t, "none"), atol=1e-5, rtol=1e-5)

    # Non-128-divisible size -- exercises the zero-loss padding path.
    xo = jax.random.normal(k3, (3, 5, 7, 11), dtype=jnp.float32)
    to = (jax.random.uniform(k4, (3, 5, 7, 11)) > 0.5).astype(jnp.float32)
    lo = jax.block_until_ready(BCEWithLogitsLoss(reduction="mean")(xo, to))
    assert jnp.allclose(lo, ref_loss(xo, to, "mean"), atol=1e-5, rtol=1e-5)
    lno = jax.block_until_ready(BCEWithLogitsLoss(reduction="none")(xo, to))
    assert jnp.allclose(lno, ref_loss(xo, to, "none"), atol=1e-5, rtol=1e-5)

    # Multi-block: 2-core sum grid with a partial last block; 'none' edge block.
    xb = jax.random.normal(k1, (4, 4, 260, 320), dtype=jnp.float32)
    tb = (jax.random.uniform(k2, (4, 4, 260, 320)) > 0.5).astype(jnp.float32)
    lb = jax.block_until_ready(BCEWithLogitsLoss(reduction="mean")(xb, tb))
    assert jnp.allclose(lb, ref_loss(xb, tb, "mean"), rtol=1e-4, atol=1e-6)
    lsb = jax.block_until_ready(BCEWithLogitsLoss(reduction="sum")(xb, tb))
    assert jnp.allclose(lsb, ref_loss(xb, tb, "sum"), rtol=1e-4)
    lnb = jax.block_until_ready(BCEWithLogitsLoss(reduction="none")(xb, tb))
    assert jnp.allclose(lnb, ref_loss(xb, tb, "none"), atol=1e-5, rtol=1e-5)

    # Odd number of blocks -- exercises the clamped/duplicated trailing block.
    xc = jax.random.normal(k3, (4, 3, 256, 1024), dtype=jnp.float32)
    tc = (jax.random.uniform(k4, (4, 3, 256, 1024)) > 0.5).astype(jnp.float32)
    lc = jax.block_until_ready(BCEWithLogitsLoss(reduction="sum")(xc, tc))
    assert jnp.allclose(lc, ref_loss(xc, tc, "sum"), rtol=1e-4)

    print("KERNEL_OK")
</pallas_src>

<mosaic_0001>
module attributes {stable_mosaic.version = 11 : i64} {
  func.func @_bce_sum_single_kernel(%arg0: memref<1x2048xf32, #tpu.memory_space<vmem>>, %arg1: memref<1x2048xf32, #tpu.memory_space<vmem>>, %arg2: memref<1x1xf32, #tpu.memory_space<vmem>>) attributes {dimension_semantics = [], scalar_prefetch = 0 : i64, scratch_operands = 0 : i64, tpu.core_type = #tpu.core_type<tc>} {
    %c0 = arith.constant 0 : index
    %c0_0 = arith.constant 0 : index
    %0 = vector.load %arg0[%c0, %c0_0] : memref<1x2048xf32, #tpu.memory_space<vmem>>, vector<1x2048xf32>
    %c0_1 = arith.constant 0 : index
    %c0_2 = arith.constant 0 : index
    %1 = vector.load %arg1[%c0_1, %c0_2] : memref<1x2048xf32, #tpu.memory_space<vmem>>, vector<1x2048xf32>
    %cst = arith.constant 0.000000e+00 : f32
    %2 = vector.broadcast %cst : f32 to vector<1x2048xf32>
    %3 = arith.maximumf %0, %2 : vector<1x2048xf32>
    %4 = arith.mulf %0, %1 : vector<1x2048xf32>
    %5 = arith.subf %3, %4 : vector<1x2048xf32>
    %6 = math.absf %0 : vector<1x2048xf32>
    %cst_3 = arith.constant 0.000000e+00 : f32
    %7 = vector.broadcast %cst_3 : f32 to vector<1x2048xf32>
    %8 = arith.subf %7, %6 : vector<1x2048xf32>
    %9 = math.exp %8 : vector<1x2048xf32>
    %10 = math.log1p %9 : vector<1x2048xf32>
    %11 = arith.addf %5, %10 : vector<1x2048xf32>
    %12 = vector.shape_cast %11 : vector<1x2048xf32> to vector<1x1x2048xf32>
    %cst_4 = arith.constant dense<0.000000e+00> : vector<1xf32>
    %13 = vector.multi_reduction <add>, %12, %cst_4 [1, 2] : vector<1x1x2048xf32> to vector<1xf32>
    %14 = vector.shape_cast %13 : vector<1xf32> to vector<1x1x1xf32>
    %15 = vector.extract %14[0, 0, 0] : f32 from vector<1x1x1xf32>
    %16 = vector.broadcast %15 : f32 to vector<1x1xf32>
    %c0_5 = arith.constant 0 : index
    %c0_6 = arith.constant 0 : index
    %17 = vector.load %arg2[%c0_5, %c0_6] : memref<1x1xf32, #tpu.memory_space<vmem>>, vector<1x1xf32>
    tpu.vector_store %arg2[%c0_5, %c0_6], %16 {strides = array<i32>} : memref<1x1xf32, #tpu.memory_space<vmem>>, vector<1x1xf32>,
    return
  }
}

</mosaic_0001>

<llo_original>
// kernel: tpu_custom_call.1
$region0: #{tpu_custom_call.1}
  #allocation0 [shape = 'u32[]', space=smem, size = 0x4, offset = 0x4, fixed_abs, tag = 'smem constant byte address 0x4 - core index']
  #allocation1 [shape = 'u32[144,128]{1,0:T(1,128)}', space=vmem, size = 0x12000, scoped, tag = 'internal scratch']
  %s0 = inlined_call_operand.hbm [shape: f32[1,2048], index: 0, kind: input, shape index: {}]
  %s1 = inlined_call_operand.hbm [shape: f32[1,2048], index: 1, kind: input, shape index: {}]
  %s2 = inlined_call_operand.hbm [shape: f32[1,1], index: 2, kind: output, shape index: {}]
  %s3 = sld [smem:[#allocation0]]
  $region26: #{tpu_custom_call.1} parent=0
    _
  %s5 = ssub.s32 1, %s3
  %s6 = scalar_select 0, %s5, %s3
  $region1: #{tpu_custom_call.1} parent=0
    #allocation2 [shape = 'u8[8192]{0}', space=vmem, size = 0x2000, scoped, tag = 'input window, operand 0, single buffered']
    #allocation3 [shape = 's32[1]{0}', space=sflag, size = 0x4, scoped, tag = 'scoped memory for tpu_custom_call.1']
    #allocation4 [shape = 's32[1]{0}', space=sflag, size = 0x4, scoped, tag = 'scoped memory for tpu_custom_call.1']
    #allocation5 [shape = 'u8[8192]{0}', space=vmem, size = 0x2000, scoped, tag = 'input window, operand 1, single buffered']
    #allocation6 [shape = 's32[1]{0}', space=sflag, size = 0x4, scoped, tag = 'scoped memory for tpu_custom_call.1']
    #allocation7 [shape = 'u8[512]{0}', space=vmem, size = 0x400, scoped, tag = 'output window, operand 0, single buffered']
    %7 = vsyncpa [#allocation3], 0
    %8 = vsyncpa [#allocation6], 0
    %9 = vsyncpa [#allocation4], 0
    // Predicated region
    $region2: #{tpu_custom_call.1} parent=1 // pred_check
      _
    $region3: #{tpu_custom_call.1} parent=1 // pred_check_branch
      %11 = sbr.rel (0) target = $region5
    $region4: #{tpu_custom_call.1} parent=1 // pred_region
      %s13 = ssub.s32 256, 256
      %14 = vsyncadd [#allocation3], %s13
      %s16 = sshll.u32 [#allocation2], 4
      %s17 = int_to_ptr.vmem [resolvable:$true] %s16
      %19 = dma.hbm_to_vmem [thread:$0]  %s0, 256, %s17, [#allocation3]
    $region5: #{tpu_custom_call.1} parent=1 // pred_fallthru
      _
    // Predicated region
    $region6: #{tpu_custom_call.1} parent=1 // pred_check
      _
    $region7: #{tpu_custom_call.1} parent=1 // pred_check_branch
      %21 = sbr.rel (0) target = $region9
    $region8: #{tpu_custom_call.1} parent=1 // pred_region
      %s23 = ssub.s32 256, 256
      %24 = vsyncadd [#allocation6], %s23
      %s26 = sshll.u32 [#allocation5], 4
      %s27 = int_to_ptr.vmem [resolvable:$true] %s26
      %29 = dma.hbm_to_vmem [thread:$0]  %s1, 256, %s27, [#allocation6]
    $region9: #{tpu_custom_call.1} parent=1 // pred_fallthru
      _
    // Predicated region
    $region10: #{tpu_custom_call.1} parent=1 // pred_check
      _
    $region11: #{tpu_custom_call.1} parent=1 // pred_check_branch
      %31 = sbr.rel (0) target = $region13
    $region12: #{tpu_custom_call.1} parent=1 // pred_region
      %32 = dma.done [#allocation3], 256
    $region13: #{tpu_custom_call.1} parent=1 // pred_fallthru
      _
    // Predicated region
    $region14: #{tpu_custom_call.1} parent=1 // pred_check
      _
    $region15: #{tpu_custom_call.1} parent=1 // pred_check_branch
      %34 = sbr.rel (0) target = $region17
    $region16: #{tpu_custom_call.1} parent=1 // pred_region
      %35 = dma.done [#allocation6], 256
    $region17: #{tpu_custom_call.1} parent=1 // pred_fallthru
      _
    %v36 = vld [vmem:[#allocation2] sm:$0xff]
    %v37 = vld [vmem:[#allocation2 + $0x8] sm:$0xff]
    %v38 = vld [vmem:[#allocation5] sm:$0xff]
    %v39 = vld [vmem:[#allocation5 + $0x8] sm:$0xff]
    %v40 = vmax.f32 %v36, 0.0
    %v41 = vmax.f32 %v37, 0.0
    %v42 = vmul.f32 %v36, %v38
    %v43 = vmul.f32 %v37, %v39
    %v44 = vsub.f32 %v40, %v42
    %v45 = vsub.f32 %v41, %v43
    %v46 = vand.u32 2147483647, %v36
    %v47 = vand.u32 2147483647, %v37
    %v48 = vsub.f32 0.0, %v46
    %v49 = vsub.f32 0.0, %v47
    %v50 = vmul.f32 %v48, 1.442695
    %v51 = vpow.pop %v50
    %v52 = vmul.f32 %v49, 1.442695
    %v53 = vpow.pop %v52
    %v54 = vadd.f32 %v51, 1.0
    %v55 = vlog2.pop %v54
    %v56 = vmul.f32 %v55, 0.6931472
    %v57 = vmul.f32 -0.5, %v51
    %v58 = vadd.f32 %v57, 1.0
    %v59 = vmul.f32 %v58, %v51
    %v60 = vand.u32 2147483647, %v51
    %vm61 = vcmp.lt.f32.partialorder %v60, 0.0004427343
    %v62 = vsel %vm61, %v59, %v56
    %v63 = vadd.f32 %v53, 1.0
    %v64 = vlog2.pop %v63
    %v65 = vmul.f32 %v64, 0.6931472
    %v66 = vmul.f32 -0.5, %v53
    %v67 = vadd.f32 %v66, 1.0
    %v68 = vmul.f32 %v67, %v53
    %v69 = vand.u32 2147483647, %v53
    %vm70 = vcmp.lt.f32.partialorder %v69, 0.0004427343
    %v71 = vsel %vm70, %v68, %v65
    %v72 = vadd.f32 %v44, %v62
    %v73 = vadd.f32 %v45, %v71
    %v76 = vlaneseq
    %v77 = vshrl.u32 %v76, 7
    %v78 = vsub.s32 0, %v77
    %v79 = vrot.slane %v72, %v78
    %v80 = vlaneseq
    %v81 = vshrl.u32 %v80, 7
    %v82 = vsub.s32 1, %v81
    %v83 = vrot.slane %v72, %v82
    %v84 = vlaneseq
    %v85 = vshrl.u32 %v84, 7
    %v86 = vsub.s32 2, %v85
    %v87 = vrot.slane %v72, %v86
    %v88 = vlaneseq
    %v89 = vshrl.u32 %v88, 7
    %v90 = vsub.s32 3, %v89
    %v91 = vrot.slane %v72, %v90
    %v92 = vlaneseq
    %v93 = vshrl.u32 %v92, 7
    %v94 = vsub.s32 4, %v93
    %v95 = vrot.slane %v72, %v94
    %v96 = vlaneseq
    %v97 = vshrl.u32 %v96, 7
    %v98 = vsub.s32 5, %v97
    %v99 = vrot.slane %v72, %v98
    %v100 = vlaneseq
    %v101 = vshrl.u32 %v100, 7
    %v102 = vsub.s32 6, %v101
    %v103 = vrot.slane %v72, %v102
    %v104 = vlaneseq
    %v105 = vshrl.u32 %v104, 7
    %v106 = vsub.s32 7, %v105
    %v107 = vrot.slane %v72, %v106
    %v108 = vlaneseq
    %v109 = vshrl.u32 %v108, 7
    %v110 = vsub.s32 0, %v109
    %v111 = vrot.slane %v73, %v110
    %v112 = vlaneseq
    %v113 = vshrl.u32 %v112, 7
    %v114 = vsub.s32 1, %v113
    %v115 = vrot.slane %v73, %v114
    %v116 = vlaneseq
    %v117 = vshrl.u32 %v116, 7
    %v118 = vsub.s32 2, %v117
    %v119 = vrot.slane %v73, %v118
    %v120 = vlaneseq
    %v121 = vshrl.u32 %v120, 7
    %v122 = vsub.s32 3, %v121
    %v123 = vrot.slane %v73, %v122
    %v124 = vlaneseq
    %v125 = vshrl.u32 %v124, 7
    %v126 = vsub.s32 4, %v125
    %v127 = vrot.slane %v73, %v126
    %v128 = vlaneseq
    %v129 = vshrl.u32 %v128, 7
    %v130 = vsub.s32 5, %v129
    %v131 = vrot.slane %v73, %v130
    %v132 = vlaneseq
    %v133 = vshrl.u32 %v132, 7
    %v134 = vsub.s32 6, %v133
    %v135 = vrot.slane %v73, %v134
    %v136 = vlaneseq
    %v137 = vshrl.u32 %v136, 7
    %v138 = vsub.s32 7, %v137
    %v139 = vrot.slane %v73, %v138
    %vm156 = vcmask 1040384
    %v157 = vsel %vm156, %v79, 0.0
    %v158 = vsel %vm156, %v83, 0.0
    %v159 = vadd.f32 %v157, %v158
    %v160 = vsel %vm156, %v87, 0.0
    %v161 = vadd.f32 %v159, %v160
    %v162 = vsel %vm156, %v91, 0.0
    %v163 = vadd.f32 %v161, %v162
    %v164 = vsel %vm156, %v95, 0.0
    %v165 = vadd.f32 %v163, %v164
    %v166 = vsel %vm156, %v99, 0.0
    %v167 = vadd.f32 %v165, %v166
    %v168 = vsel %vm156, %v103, 0.0
    %v169 = vadd.f32 %v167, %v168
    %v170 = vsel %vm156, %v107, 0.0
    %v171 = vadd.f32 %v169, %v170
    %v172 = vsel %vm156, %v111, 0.0
    %v173 = vadd.f32 %v171, %v172
    %v174 = vsel %vm156, %v115, 0.0
    %v175 = vadd.f32 %v173, %v174
    %v176 = vsel %vm156, %v119, 0.0
    %v177 = vadd.f32 %v175, %v176
    %v178 = vsel %vm156, %v123, 0.0
    %v179 = vadd.f32 %v177, %v178
    %v180 = vsel %vm156, %v127, 0.0
    %v181 = vadd.f32 %v179, %v180
    %v182 = vsel %vm156, %v131, 0.0
    %v183 = vadd.f32 %v181, %v182
    %v184 = vsel %vm156, %v135, 0.0
    %v185 = vadd.f32 %v183, %v184
    %v186 = vsel %vm156, %v139, 0.0
    %v187 = vadd.f32 %v185, %v186
    %188 = vadd.xlane.f32.xlu0 %v187
    %v189 = vpop.xlane.xlu0 %188
    %v190 = vrot.slane %v189, 4
    %v191 = vadd.f32 %v189, %v190
    %v192 = vrot.slane %v191, 2
    %v193 = vadd.f32 %v191, %v192
    %v194 = vrot.slane %v193, 1
    %v195 = vadd.f32 %v193, %v194
    %s196 = vtos %v195
    %v197 = vstv %s196
    %vm198 = vcmask 0
    %199 = vst.msk [vmem:[#allocation7] sm:$0x1] %vm198, %v197
    // Predicated region
    $region18: #{tpu_custom_call.1} parent=1 // pred_check
      _
    $region19: #{tpu_custom_call.1} parent=1 // pred_check_branch
      %201 = sbr.rel (0) target = $region21
    $region20: #{tpu_custom_call.1} parent=1 // pred_region
      %s203 = ssub.s32 16, 16
      %204 = vsyncadd [#allocation4], %s203
      %s206 = sshll.u32 [#allocation7], 4
      %s207 = int_to_ptr.vmem [resolvable:$true] %s206
      %209 = dma.vmem_to_hbm [thread:$0]  %s207, 16, %s2, [#allocation4]
    $region21: #{tpu_custom_call.1} parent=1 // pred_fallthru
      _
    // Predicated region
    $region22: #{tpu_custom_call.1} parent=1 // pred_check
      _
    $region23: #{tpu_custom_call.1} parent=1 // pred_check_branch
      %211 = sbr.rel (0) target = $region25
    $region24: #{tpu_custom_call.1} parent=1 // pred_region
      %212 = dma.done [#allocation4], 16
    $region25: #{tpu_custom_call.1} parent=1 // pred_fallthru
      _
    %213 = vsyncpa [#allocation3], 1
    %214 = vsyncpa [#allocation6], 1
    %215 = vsyncpa [#allocation4], 1

</llo_original>
